<compile_context>
chip_gen: v6e
topology: v6e:2x2x1
jax: 0.10.0
libtpu: 0.0.40
codegen_flags: <defaults>
</compile_context>

<pallas_src>
import functools
from typing import NamedTuple, Optional

import jax
import jax.numpy as jnp
from jax.experimental import pallas as pl
from jax.experimental.pallas import tpu as pltpu


def _round_up(x, m):
    return ((x + m - 1) // m) * m


def _pick_tile(dim_p, max_tile, granule=128):
    """Largest multiple of `granule` that divides dim_p and is <= max_tile."""
    assert dim_p % granule == 0
    n = dim_p // granule
    best = granule
    for d in range(1, n + 1):
        if n % d == 0 and d * granule <= max_tile:
            best = d * granule
    return best


# ---------------------------------------------------------------------------
# Kernels
# ---------------------------------------------------------------------------
def _fc_kernel_f32out(x_ref, w_ref, b_ref, o_ref):
    # x_ref: [tm, tk], w_ref: [tk, tn] (pre-transposed W), b_ref: [1, tn] f32,
    # o_ref: [tm, tn] f32 (resident across k -> used directly as accumulator).
    k = pl.program_id(2)

    @pl.when(k == 0)
    def _():
        o_ref[...] = jnp.zeros_like(o_ref)

    o_ref[...] += jnp.dot(x_ref[...], w_ref[...],
                          preferred_element_type=jnp.float32)

    @pl.when(k == pl.num_programs(2) - 1)
    def _():
        o_ref[...] = o_ref[...] + b_ref[...]


def _fc_kernel_acc(x_ref, w_ref, b_ref, o_ref, acc_ref):
    # Same as above but with an f32 VMEM accumulator for narrow output dtypes.
    k = pl.program_id(2)

    @pl.when(k == 0)
    def _():
        acc_ref[...] = jnp.zeros_like(acc_ref)

    acc_ref[...] += jnp.dot(x_ref[...], w_ref[...],
                            preferred_element_type=jnp.float32)

    @pl.when(k == pl.num_programs(2) - 1)
    def _():
        o_ref[...] = (acc_ref[...] + b_ref[...]).astype(o_ref.dtype)


# ---------------------------------------------------------------------------
# One-time parameter preparation (static weights -> do the layout work once)
# ---------------------------------------------------------------------------
class PreppedClassifier(NamedTuple):
    w_t: jax.Array     # [Dp, Cp] pre-transposed, zero-padded, compute dtype
    bias: jax.Array    # [1, Cp] f32, zero-padded
    class_num: int
    in_dim: int


def prepare_params(weight, bias, *, compute_dtype=jnp.bfloat16):
    """weight: [C, D] (PyTorch layout), bias: [C].

    Casts the weight once (default bf16 -> halves weight HBM bytes; matmul
    accumulation stays f32), transposes to [D, C] so the kernel contraction
    is a plain (row, col) matmul (no hidden transpose), and zero-pads both
    dims to 128-multiples so all tiles are lane-dense.
    """
    C, D = weight.shape
    assert bias.shape == (C,)
    Dp = _round_up(D, 128)
    Cp = _round_up(C, 128)

    w_t = weight.T.astype(compute_dtype)                      # [D, C]
    w_t = jnp.pad(w_t, ((0, Dp - D), (0, Cp - C)))            # [Dp, Cp]
    b2 = jnp.pad(bias.astype(jnp.float32).reshape(1, C),
                 ((0, 0), (0, Cp - C)))                       # [1, Cp]
    return PreppedClassifier(w_t=w_t, bias=b2, class_num=C, in_dim=D)


# ---------------------------------------------------------------------------
# Forward
# ---------------------------------------------------------------------------
def feat_classifier_forward(x, params: PreppedClassifier, *,
                            tm_max=256, tn_max=1024, tk_max=1024,
                            weight_buffers: Optional[int] = None,
                            allow_fallback=True):
    """PyTorch nn.Linear semantics: x @ W.T + b.

    x: [B, D]. Output dtype matches x dtype; matmul runs in params.w_t.dtype
    with f32 accumulation.
    """
    B, D = x.shape
    C = params.class_num
    assert D == params.in_dim
    Dp, Cp = params.w_t.shape
    out_dtype = x.dtype
    compute_dtype = params.w_t.dtype

    # Small-problem fallback: padding C up to 128 would dominate the work;
    # XLA's native dot wins at this size on every generation.
    if allow_fallback and C < 128 and B * D <= 64 * 1024:
        xc = x.astype(compute_dtype)
        out = jnp.dot(xc, params.w_t[:D, :C],
                      preferred_element_type=jnp.float32) + params.bias[0, :C]
        return out.astype(out_dtype)

    if x.dtype != compute_dtype:
        x = x.astype(compute_dtype)

    comp_isz = jnp.dtype(compute_dtype).itemsize
    out_isz = jnp.dtype(out_dtype).itemsize

    # Tile sizes: lane-dense (128) on C/D; sublane granule 16 for sub-32-bit x.
    sub = 8 if comp_isz >= 4 else (16 if comp_isz == 2 else 32)
    tm = min(_round_up(B, sub), _round_up(tm_max, sub))
    tn = _pick_tile(Cp, tn_max)
    tk = _pick_tile(Dp, tk_max)
    Bp = _round_up(B, tm)

    # v7x dual-TC: keep >=2 blocks along a "parallel" axis when possible.
    if Bp // tm == 1 and Cp // tn == 1 and Cp // 128 >= 2:
        tn = _pick_tile(Cp, max(tn // 2, 128))

    # Zero-pad x to tile-aligned shape (padded D contributes nothing; padded
    # B rows are sliced away below).  Weight/bias are already padded at prep.
    if (Bp, Dp) != (B, D):
        x = jnp.pad(x, ((0, Bp - B), (0, Dp - D)))

    grid = (Bp // tm, Cp // tn, Dp // tk)

    use_acc_scratch = out_dtype != jnp.float32
    kernel = _fc_kernel_acc if use_acc_scratch else _fc_kernel_f32out
    scratch = [pltpu.VMEM((tm, tn), jnp.float32)] if use_acc_scratch else []

    # VMEM actually needed (double-buffered tiles + accumulator), with
    # headroom; capped at 48 MiB so we never request v7x's full 64 MiB.
    need = (2 * (tm * tk + tk * tn) * comp_isz
            + 2 * tm * tn * (4 if not use_acc_scratch else out_isz)
            + 2 * tn * 4
            + (tm * tn * 4 if use_acc_scratch else 0))
    vmem_limit = int(min(max(2 * need, 16 * 1024 * 1024), 48 * 1024 * 1024))

    gi, gj, gk = grid
    cost = pl.CostEstimate(
        flops=2 * Bp * Dp * Cp,
        bytes_accessed=(Bp * Dp * comp_isz * gj      # x re-read per col block
                        + Dp * Cp * comp_isz * gi    # W re-read per row block
                        + Cp * 4 * gi
                        + Bp * Cp * out_isz),
        transcendentals=0,
    )

    w_spec_kwargs = {}
    if weight_buffers is not None and weight_buffers > 2:
        # Deeper weight-DMA pipelining (useful on v5e in the GEMV regime).
        w_spec_kwargs["pipeline_mode"] = pl.Buffered(weight_buffers)

    out_padded = pl.pallas_call(
        kernel,
        out_shape=jax.ShapeDtypeStruct((Bp, Cp), out_dtype),
        grid_spec=pltpu.PrefetchScalarGridSpec(
            num_scalar_prefetch=0,
            grid=grid,
            in_specs=[
                pl.BlockSpec((tm, tk), lambda i, j, k: (i, k)),              # x
                pl.BlockSpec((tk, tn), lambda i, j, k: (k, j),               # W.T
                             **w_spec_kwargs),
                pl.BlockSpec((1, tn), lambda i, j, k: (0, j)),               # bias
            ],
            out_specs=pl.BlockSpec((tm, tn), lambda i, j, k: (i, j)),
            scratch_shapes=scratch,
        ),
        compiler_params=pltpu.CompilerParams(
            dimension_semantics=("parallel", "parallel", "arbitrary"),
            vmem_limit_bytes=vmem_limit,
        ),
        cost_estimate=cost,
    )(x, params.w_t, params.bias)

    if (Bp, Cp) != (B, C):
        out_padded = out_padded[:B, :C]
    return out_padded


def init_params(key, class_num, bottleneck_dim):
    """Matches init_weights for Linear: xavier_normal_ weight, zero bias."""
    fan_in, fan_out = bottleneck_dim, class_num
    std = (2.0 / (fan_in + fan_out)) ** 0.5
    w = std * jax.random.normal(key, (class_num, bottleneck_dim), jnp.float32)
    b = jnp.zeros((class_num,), jnp.float32)
    return w, b
    # TODO(synk): type='wn' (weight-normalized Linear) not implemented; default type='linear' only.


if __name__ == "__main__":
    key = jax.random.PRNGKey(0)
    k1, k2, k3, k4 = jax.random.split(key, 4)

    # --- Path 1: module's demo shape (C=16, D=256, B=8) -> small-problem
    # fallback (plain XLA dot), exact f32 semantics.
    C1, D1, B1 = 16, 256, 8
    w1, b1 = init_params(k1, C1, D1)
    p1 = prepare_params(w1, b1, compute_dtype=jnp.float32)
    x1 = jax.random.normal(k2, (B1, D1), jnp.float32)
    out1 = feat_classifier_forward(x1, p1)
    ref1 = x1 @ w1.T + b1
    assert out1.shape == (B1, C1)
    assert jnp.allclose(out1, ref1, atol=1e-5, rtol=1e-5)

    # --- Path 2: Pallas tiled kernel, f32 compute (tight check).
    C2, D2, B2 = 130, 256, 48
    w2, b2 = init_params(k3, C2, D2)
    x2 = jax.random.normal(k4, (B2, D2), jnp.float32)
    ref2 = x2 @ w2.T + b2

    p2_f32 = prepare_params(w2, b2, compute_dtype=jnp.float32)
    out2 = feat_classifier_forward(x2, p2_f32)
    assert out2.shape == (B2, C2)
    assert jnp.allclose(out2, ref2, atol=1e-4, rtol=1e-4)

    # --- Path 3: same problem with default bf16 weights (f32 accumulation).
    p2_bf16 = prepare_params(w2, b2)   # compute_dtype=bf16 by default
    out3 = feat_classifier_forward(x2, p2_bf16)
    assert out3.shape == (B2, C2)
    assert jnp.allclose(out3, ref2, atol=1e-1, rtol=1e-1)

    jax.block_until_ready((out1, out2, out3))
    print("KERNEL_OK")
</pallas_src>

<mosaic_0001>
module attributes {stable_mosaic.version = 11 : i64} {
  func.func @_fc_kernel_f32out(%arg0: i32, %arg1: i32, %arg2: i32, %arg3: memref<48x256xf32, #tpu.memory_space<vmem>>, %arg4: memref<256x128xf32, #tpu.memory_space<vmem>>, %arg5: memref<1x128xf32, #tpu.memory_space<vmem>>, %arg6: memref<48x128xf32, #tpu.memory_space<vmem>>) attributes {dimension_semantics = [#tpu.dimension_semantics<parallel>, #tpu.dimension_semantics<parallel>, #tpu.dimension_semantics<arbitrary>], iteration_bounds = array<i64: 1, 2, 1>, scalar_prefetch = 0 : i64, scratch_operands = 0 : i64, tpu.core_type = #tpu.core_type<tc>, window_params = [{transform_indices = @transform_0, window_bounds = array<i64: 48, 256>}, {transform_indices = @transform_1, window_bounds = array<i64: 256, 128>}, {transform_indices = @transform_2, window_bounds = array<i64: 1, 128>}, {transform_indices = @transform_3, window_bounds = array<i64: 48, 128>}]} {
    %c0_i32 = arith.constant 0 : i32
    %0 = arith.cmpi eq, %arg2, %c0_i32 : i32
    %1 = arith.extui %0 : i1 to i32
    %c0_i32_0 = arith.constant 0 : i32
    %2 = arith.cmpi ne, %1, %c0_i32_0 : i32
    scf.if %2 {
      %cst_10 = arith.constant 0.000000e+00 : f32
      %12 = vector.broadcast %cst_10 : f32 to vector<48x128xf32>
      %c0_11 = arith.constant 0 : index
      %c0_12 = arith.constant 0 : index
      %13 = vector.load %arg6[%c0_11, %c0_12] : memref<48x128xf32, #tpu.memory_space<vmem>>, vector<48x128xf32>
      tpu.vector_store %arg6[%c0_11, %c0_12], %12 {strides = array<i32>} : memref<48x128xf32, #tpu.memory_space<vmem>>, vector<48x128xf32>,
    } else {
    }
    %c0 = arith.constant 0 : index
    %c0_1 = arith.constant 0 : index
    %3 = vector.load %arg6[%c0, %c0_1] : memref<48x128xf32, #tpu.memory_space<vmem>>, vector<48x128xf32>
    %c0_2 = arith.constant 0 : index
    %c0_3 = arith.constant 0 : index
    %4 = vector.load %arg3[%c0_2, %c0_3] : memref<48x256xf32, #tpu.memory_space<vmem>>, vector<48x256xf32>
    %c0_4 = arith.constant 0 : index
    %c0_5 = arith.constant 0 : index
    %5 = vector.load %arg4[%c0_4, %c0_5] : memref<256x128xf32, #tpu.memory_space<vmem>>, vector<256x128xf32>
    %cst = arith.constant dense<0.000000e+00> : vector<48x128xf32>
    %6 = tpu.matmul %4, %5, %cst {dimension_numbers = #tpu.dot_dimension_numbers<[1], [0], [0], [1], [0, 0, 1, 1], [], []>} : vector<48x256xf32>, vector<256x128xf32>, vector<48x128xf32> -> vector<48x128xf32>
    %7 = arith.addf %3, %6 : vector<48x128xf32>
    %c0_6 = arith.constant 0 : index
    %c0_7 = arith.constant 0 : index
    %8 = vector.load %arg6[%c0_6, %c0_7] : memref<48x128xf32, #tpu.memory_space<vmem>>, vector<48x128xf32>
    tpu.vector_store %arg6[%c0_6, %c0_7], %7 {strides = array<i32>} : memref<48x128xf32, #tpu.memory_space<vmem>>, vector<48x128xf32>,
    %c0_i32_8 = arith.constant 0 : i32
    %9 = arith.cmpi eq, %arg2, %c0_i32_8 : i32
    %10 = arith.extui %9 : i1 to i32
    %c0_i32_9 = arith.constant 0 : i32
    %11 = arith.cmpi ne, %10, %c0_i32_9 : i32
    scf.if %11 {
      %c0_10 = arith.constant 0 : index
      %c0_11 = arith.constant 0 : index
      %12 = vector.load %arg6[%c0_10, %c0_11] : memref<48x128xf32, #tpu.memory_space<vmem>>, vector<48x128xf32>
      %c0_12 = arith.constant 0 : index
      %c0_13 = arith.constant 0 : index
      %13 = vector.load %arg5[%c0_12, %c0_13] : memref<1x128xf32, #tpu.memory_space<vmem>>, vector<1x128xf32>
      %14 = vector.broadcast %13 : vector<1x128xf32> to vector<48x128xf32>
      %15 = arith.addf %12, %14 : vector<48x128xf32>
      %c0_14 = arith.constant 0 : index
      %c0_15 = arith.constant 0 : index
      %16 = vector.load %arg6[%c0_14, %c0_15] : memref<48x128xf32, #tpu.memory_space<vmem>>, vector<48x128xf32>
      tpu.vector_store %arg6[%c0_14, %c0_15], %15 {strides = array<i32>} : memref<48x128xf32, #tpu.memory_space<vmem>>, vector<48x128xf32>,
    } else {
    }
    return
  }
  func.func @transform_0(%arg0: i32, %arg1: i32, %arg2: i32) -> (i32, i32) {
    %c0_i32 = arith.constant 0 : i32
    return %arg0, %arg2 : i32, i32
  }
  func.func @transform_1(%arg0: i32, %arg1: i32, %arg2: i32) -> (i32, i32) {
    %c0_i32 = arith.constant 0 : i32
    return %arg2, %arg1 : i32, i32
  }
  func.func @transform_2(%arg0: i32, %arg1: i32, %arg2: i32) -> (i32, i32) {
    %c0_i32 = arith.constant 0 : i32
    %c0_i32_0 = arith.constant 0 : i32
    return %c0_i32, %arg1 : i32, i32
  }
  func.func @transform_3(%arg0: i32, %arg1: i32, %arg2: i32) -> (i32, i32) {
    %c0_i32 = arith.constant 0 : i32
    return %arg0, %arg1 : i32, i32
  }
}

</mosaic_0001>

<llo_original>
// kernel: tpu_custom_call.1
$region0: #{tpu_custom_call.1}
  #allocation0 [shape = 'u32[]', space=smem, size = 0x4, offset = 0x4, fixed_abs, tag = 'smem constant byte address 0x4 - core index']
  #allocation1 [shape = 'u32[144,128]{1,0:T(1,128)}', space=vmem, size = 0x12000, scoped, tag = 'internal scratch']
  %s0 = inlined_call_operand.hbm [shape: f32[48,256], index: 0, kind: input, shape index: {}]
  %s1 = inlined_call_operand.hbm [shape: f32[256,256], index: 1, kind: input, shape index: {}]
  %s2 = inlined_call_operand.vmem [shape: f32[1,256], index: 2, kind: input, shape index: {}]
  %s3 = inlined_call_operand.hbm [shape: f32[48,256], index: 3, kind: output, shape index: {}]
  %s4 = sld [smem:[#allocation0]]
  $region61: #{tpu_custom_call.1} parent=0
    _
  %s6 = ssub.s32 1, %s4
  %s7 = scalar_select 0, %s6, %s4
  $region1: #{tpu_custom_call.1} parent=0
    #allocation2 [shape = 'u8[49152]{0}', space=vmem, size = 0xc000, scoped, tag = 'input window, operand 0, single buffered']
    #allocation3 [shape = 's32[2]{0}', space=sflag, size = 0x8, scoped, tag = 'scoped memory for tpu_custom_call.1']
    #allocation4 [shape = 's32[2]{0}', space=sflag, size = 0x8, scoped, tag = 'scoped memory for tpu_custom_call.1']
    #allocation5 [shape = 'u8[262144]{0}', space=vmem, size = 0x40000, scoped, tag = 'input window, operand 1']
    #allocation6 [shape = 's32[2]{0}', space=sflag, size = 0x8, scoped, tag = 'scoped memory for tpu_custom_call.1']
    #allocation7 [shape = 'u8[49152]{0}', space=vmem, size = 0xc000, scoped, tag = 'output window, operand 0']
    %8 = vsyncpa [#allocation3], 0
    %9 = vsyncpa [#allocation6], 0
    %s10 = scalar_lea.sflag [#allocation6], 1
    %11 = vsyncpa %s10, 0
    %12 = vsyncpa [#allocation4], 0
    %s13 = scalar_lea.sflag [#allocation4], 1
    %14 = vsyncpa %s13, 0
    loop: start=0, step=1, limit=4
    $region2: #{tpu_custom_call.1} parent=1 // loop_pre_header
      _
    $region3: #{tpu_custom_call.1} parent=1 // loop_header
      %s16 = sphi 0, %s20
      %p17 = scmp.ge.s32.totalorder %s16, 4
      %s23 = sphi 0, %s42
      %s24 = sphi 0, %s38
      %s25 = sphi 0, %s34
      %s26 = sphi 0, %s23
      %s27 = sphi 0, %s24
      %s28 = sphi 0, %s25
      %s29 = sphi 0, %s26
      %s30 = sphi 0, %s27
      %s31 = sphi 0, %s28
      %s47 = sphi 0, %s49
      %s50 = sphi 0, %s47
      %s51 = sphi 0, %s50
      %s67 = sphi 0, %s51
      %s75 = sphi 0, %s77
      %s78 = sphi 0, %s75
      %s79 = sphi 0, %s78
      %s95 = sphi 0, %s79
      %s101 = sphi 0, %s103
      %s104 = sphi 0, %s101
      %s105 = sphi 0, %s104
      %s121 = sphi 0, %s105
      %s129 = sphi 0, %s131
      %s132 = sphi 0, %s129
      %s133 = sphi 0, %s132
      %s149 = sphi 0, %s133
    $region4: #{tpu_custom_call.1} parent=1 // loop_header_branch
      %19 = sbr.rel (%p17) target = $region8
    $region5: #{tpu_custom_call.1} parent=1 // loop_body
      %s21 = ssub.s32 %s16, 1
      %s22 = ssub.s32 %s16, 2
      %s32 = sadd.s32 1, %s25
      %p33 = scmp.ge.s32.totalorder %s32, 1
      %s34 = scalar_select %p33, 0, %s32
      %s35 = sadd.s32 1, %s24
      %s36 = scalar_select %p33, %s35, %s24
      %p37 = scmp.ge.s32.totalorder %s36, 2
      %s38 = scalar_select %p37, 0, %s36
      %s39 = sadd.s32 1, %s23
      %s40 = scalar_select %p37, %s39, %s23
      %p41 = scmp.ge.s32.totalorder %s40, 1
      %s42 = scalar_select %p41, 0, %s40
      %s43 = ssub.s32 %s23, %s42
      %s44 = ssub.s32 %s25, %s34
      %s45 = sor.u32 %s43, %s44
      %p46 = scmp.eq.s32.totalorder %s45, 0
      %s48 = sadd.s32 %s47, 1
      %s49 = scalar_select %p46, %s47, %s48
      %p52 = pneg %p46
      %p53 = scmp.eq.s32.totalorder %s16, 1
      %p54 = por %p52, %p53
      %p55 = scmp.ne.s32.totalorder %s47, %s50
      %p56 = scmp.eq.s32.totalorder %s16, 0
      %p57 = por %p55, %p56
      %p58 = scmp.ne.s32.totalorder %s47, %s50
      %p59 = scmp.eq.s32.totalorder %s21, 1
      %p60 = por %p58, %p59
      %p61 = scmp.ne.s32.totalorder %s50, %s51
      %p62 = scmp.eq.s32.totalorder %s21, 0
      %p63 = por %p61, %p62
      %p64 = scmp.ne.s32.totalorder %s50, %s51
      %p65 = scmp.eq.s32.totalorder %s22, 1
      %p66 = por %p64, %p65
      %p68 = scmp.ne.s32.totalorder %s51, %s67
      %p69 = scmp.eq.s32.totalorder %s22, 0
      %p70 = por %p68, %p69
      %s71 = ssub.s32 %s25, %s34
      %s72 = ssub.s32 %s24, %s38
      %s73 = sor.u32 %s71, %s72
      %p74 = scmp.eq.s32.totalorder %s73, 0
      %s76 = sadd.s32 %s75, 1
      %s77 = scalar_select %p74, %s75, %s76
      %p80 = pneg %p74
      %p81 = scmp.eq.s32.totalorder %s16, 1
      %p82 = por %p80, %p81
      %p83 = scmp.ne.s32.totalorder %s75, %s78
      %p84 = scmp.eq.s32.totalorder %s16, 0
      %p85 = por %p83, %p84
      %p86 = scmp.ne.s32.totalorder %s75, %s78
      %p87 = scmp.eq.s32.totalorder %s21, 1
      %p88 = por %p86, %p87
      %p89 = scmp.ne.s32.totalorder %s78, %s79
      %p90 = scmp.eq.s32.totalorder %s21, 0
      %p91 = por %p89, %p90
      %p92 = scmp.ne.s32.totalorder %s78, %s79
      %p93 = scmp.eq.s32.totalorder %s22, 1
      %p94 = por %p92, %p93
      %p96 = scmp.ne.s32.totalorder %s79, %s95
      %p97 = scmp.eq.s32.totalorder %s22, 0
      %p98 = por %p96, %p97
      %s99 = ssub.s32 %s24, %s38
      %p100 = scmp.eq.s32.totalorder %s99, 0
      %s102 = sadd.s32 %s101, 1
      %s103 = scalar_select %p100, %s101, %s102
      %p106 = pneg %p100
      %p107 = scmp.eq.s32.totalorder %s16, 1
      %p108 = por %p106, %p107
      %p109 = scmp.ne.s32.totalorder %s101, %s104
      %p110 = scmp.eq.s32.totalorder %s16, 0
      %p111 = por %p109, %p110
      %p112 = scmp.ne.s32.totalorder %s101, %s104
      %p113 = scmp.eq.s32.totalorder %s21, 1
      %p114 = por %p112, %p113
      %p115 = scmp.ne.s32.totalorder %s104, %s105
      %p116 = scmp.eq.s32.totalorder %s21, 0
      %p117 = por %p115, %p116
      %p118 = scmp.ne.s32.totalorder %s104, %s105
      %p119 = scmp.eq.s32.totalorder %s22, 1
      %p120 = por %p118, %p119
      %p122 = scmp.ne.s32.totalorder %s105, %s121
      %p123 = scmp.eq.s32.totalorder %s22, 0
      %p124 = por %p122, %p123
      %s125 = ssub.s32 %s23, %s42
      %s126 = ssub.s32 %s24, %s38
      %s127 = sor.u32 %s125, %s126
      %p128 = scmp.eq.s32.totalorder %s127, 0
      %s130 = sadd.s32 %s129, 1
      %s131 = scalar_select %p128, %s129, %s130
      %p134 = pneg %p128
      %p135 = scmp.eq.s32.totalorder %s16, 1
      %p136 = por %p134, %p135
      %p137 = scmp.ne.s32.totalorder %s129, %s132
      %p138 = scmp.eq.s32.totalorder %s16, 0
      %p139 = por %p137, %p138
      %p140 = scmp.ne.s32.totalorder %s129, %s132
      %p141 = scmp.eq.s32.totalorder %s21, 1
      %p142 = por %p140, %p141
      %p143 = scmp.ne.s32.totalorder %s132, %s133
      %p144 = scmp.eq.s32.totalorder %s21, 0
      %p145 = por %p143, %p144
      %p146 = scmp.ne.s32.totalorder %s132, %s133
      %p147 = scmp.eq.s32.totalorder %s22, 1
      %p148 = por %p146, %p147
      %p150 = scmp.ne.s32.totalorder %s133, %s149
      %p151 = scmp.eq.s32.totalorder %s22, 0
      %p152 = por %p150, %p151
      %p153 = scmp.le.s32.totalorder 1, %s16
      %p154 = scmp.lt.s32.totalorder %s16, 3
      %p155 = pnand %p153, %p154
      %p156 = pneg %p155
      // Predicated region
      $region9: #{tpu_custom_call.1} parent=5 // pred_check
        _
      $region10: #{tpu_custom_call.1} parent=5 // pred_check_branch
        %158 = sbr.rel (%p155) target = $region12
      $region11: #{tpu_custom_call.1} parent=5 // pred_region
        %s159 = ssub.s32 %s16, 1
        // Predicated region
        $region13: #{tpu_custom_call.1} parent=11 // pred_check
          %p160 = pneg %p63
        $region14: #{tpu_custom_call.1} parent=11 // pred_check_branch
          %162 = sbr.rel (%p160) target = $region16
        $region15: #{tpu_custom_call.1} parent=11 // pred_region
          %s163 = smul.u32 6, %s26
          %s164 = smul.u32 2, %s28
          %s166 = ssub.s32 1536, 1536
          %167 = vsyncadd [#allocation3], %s166
          %s168 = smul.addr %s163, 2
          %s169 = sadd.s32 %s164, %s168
          %s170 = smul.addr %s169, 128
          %s171 = scalar_lea.hbm %s0, %s170
          %s172 = sshll.u32 [#allocation2], 4
          %s173 = int_to_ptr.vmem [resolvable:$true] %s172
          %178 = dma.hbm_to_vmem [thread:$0]  %s171, 1536, %s173, [#allocation3], 256, 256, 16
        $region16: #{tpu_custom_call.1} parent=11 // pred_fallthru
          _
      $region12: #{tpu_custom_call.1} parent=5 // pred_fallthru
        _
      %p179 = scmp.lt.s32.totalorder %s16, 2
      // Predicated region
      $region17: #{tpu_custom_call.1} parent=5 // pred_check
        %p180 = pneg %p179
      $region18: #{tpu_custom_call.1} parent=5 // pred_check_branch
        %182 = sbr.rel (%p180) target = $region20
      $region19: #{tpu_custom_call.1} parent=5 // pred_region
        // Predicated region
        $region21: #{tpu_custom_call.1} parent=19 // pred_check
          %p183 = pneg %p85
        $region22: #{tpu_custom_call.1} parent=19 // pred_check_branch
          %185 = sbr.rel (%p183) target = $region24
        $region23: #{tpu_custom_call.1} parent=19 // pred_region
          %s186 = sand.u32 %s75, 1
          %s187 = scalar_lea.sflag [#allocation6], %s186
          %s188 = sand.u32 %s75, 1
          %s189 = smul.addr %s188, 256
          %s190 = scalar_lea.vmem [#allocation5], %s189
          %s191 = smul.u32 32, %s25
          %s193 = ssub.s32 4096, 4096
          %194 = vsyncadd %s187, %s193
          %s195 = smul.addr %s191, 2
          %s196 = sadd.s32 %s24, %s195
          %s197 = smul.addr %s196, 128
          %s198 = scalar_lea.hbm %s1, %s197
          %s199 = sshll.u32 %s190, 4
          %s200 = int_to_ptr.vmem [resolvable:$true] %s199
          %205 = dma.hbm_to_vmem [thread:$0]  %s198, 4096, %s200, %s187, 256, 128, 8
        $region24: #{tpu_custom_call.1} parent=19 // pred_fallthru
          _
        // Predicated region
        $region25: #{tpu_custom_call.1} parent=19 // pred_check
          %p206 = pneg %p111
        $region26: #{tpu_custom_call.1} parent=19 // pred_check_branch
          %208 = sbr.rel (%p206) target = $region28
        $region27: #{tpu_custom_call.1} parent=19 // pred_region
          %p209 = scmp.lt.s32.totalorder %s24, 1
          %s210 = scalar_select %p209, %s24, 1
          %s211 = scalar_lea.vmem %s2, %s210
        $region28: #{tpu_custom_call.1} parent=19 // pred_fallthru
          _
      $region20: #{tpu_custom_call.1} parent=5 // pred_fallthru
        _
      %p212 = scmp.le.s32.totalorder 1, %s16
      %p213 = scmp.lt.s32.totalorder %s16, 3
      %p214 = pnand %p212, %p213
      %p215 = pneg %p214
      // Predicated region
      $region29: #{tpu_custom_call.1} parent=5 // pred_check
        _
      $region30: #{tpu_custom_call.1} parent=5 // pred_check_branch
        %217 = sbr.rel (%p214) target = $region32
      $region31: #{tpu_custom_call.1} parent=5 // pred_region
        %s218 = ssub.s32 %s16, 1
        // Predicated region
        $region33: #{tpu_custom_call.1} parent=31 // pred_check
          %p219 = pneg %p63
        $region34: #{tpu_custom_call.1} parent=31 // pred_check_branch
          %221 = sbr.rel (%p219) target = $region36
        $region35: #{tpu_custom_call.1} parent=31 // pred_region
          %222 = dma.done [#allocation3], 1536
        $region36: #{tpu_custom_call.1} parent=31 // pred_fallthru
          _
        %s223 = sand.u32 %s78, 1
        %s224 = scalar_lea.sflag [#allocation6], %s223
        %s225 = sand.u32 %s78, 1
        %s226 = smul.addr %s225, 256
        %s227 = scalar_lea.vmem [#allocation5], %s226
        // Predicated region
        $region37: #{tpu_custom_call.1} parent=31 // pred_check
          %p228 = pneg %p91
        $region38: #{tpu_custom_call.1} parent=31 // pred_check_branch
          %230 = sbr.rel (%p228) target = $region40
        $region39: #{tpu_custom_call.1} parent=31 // pred_region
          %231 = dma.done %s224, 4096
        $region40: #{tpu_custom_call.1} parent=31 // pred_fallthru
          _
        %p232 = pneg %p63
        %p233 = pneg %p60
        %s234 = sand.u32 %s78, 1
        %s235 = scalar_lea.sflag [#allocation6], %s234
        %s236 = sand.u32 %s78, 1
        %s237 = smul.addr %s236, 256
        %s238 = scalar_lea.vmem [#allocation5], %s237
        %p239 = pneg %p91
        %p240 = pneg %p88
        %p241 = scmp.lt.s32.totalorder %s27, 1
        %s242 = scalar_select %p241, %s27, 1
        %s243 = scalar_lea.vmem %s2, %s242
        %p244 = pneg %p117
        %p245 = pneg %p114
        %p246 = pneg %p145
        %p247 = pneg %p142
        %s248 = sand.u32 %s132, 1
        %s249 = scalar_lea.sflag [#allocation4], %s248
        %s250 = sand.u32 %s132, 1
        %s251 = smul.addr %s250, 48
        %s252 = scalar_lea.vmem [#allocation7], %s251
        %s253 = smul.u32 6, %s26
        %s254 = smul.u32 2, %s28
        %s255 = smul.u32 32, %s28
        %p256 = scmp.lt.s32.totalorder %s27, 1
        %s257 = scalar_select %p256, %s27, 1
        %s258 = scalar_lea.vmem %s2, %s257
        %s259 = smul.u32 6, %s26
        %p260 = scmp.eq.s32.totalorder %s28, 0
        // Predicated region
        $region41: #{tpu_custom_call.1} parent=31 // pred_check
          %p261 = pneg %p260
        $region42: #{tpu_custom_call.1} parent=31 // pred_check_branch
          %263 = sbr.rel (%p261) target = $region44
        $region43: #{tpu_custom_call.1} parent=31 // pred_region
          %264 = vst [vmem:[%s252] sm:$0xff] 0.0
          %265 = vst [vmem:[%s252 + $0x8] sm:$0xff] 0.0
          %266 = vst [vmem:[%s252 + $0x10] sm:$0xff] 0.0
          %267 = vst [vmem:[%s252 + $0x18] sm:$0xff] 0.0
          %268 = vst [vmem:[%s252 + $0x20] sm:$0xff] 0.0
          %269 = vst [vmem:[%s252 + $0x28] sm:$0xff] 0.0
        $region44: #{tpu_custom_call.1} parent=31 // pred_fallthru
          _
        %v270 = vld [vmem:[%s252] sm:$0xff]
        %v271 = vld [vmem:[%s252 + $0x8] sm:$0xff]
        %v272 = vld [vmem:[%s252 + $0x10] sm:$0xff]
        %v273 = vld [vmem:[%s252 + $0x18] sm:$0xff]
        %v274 = vld [vmem:[%s252 + $0x20] sm:$0xff]
        %v275 = vld [vmem:[%s252 + $0x28] sm:$0xff]
        %v276 = vld [vmem:[#allocation2] sm:$0xff]
        %v277 = vld [vmem:[#allocation2 + $0x8] sm:$0xff]
        %v278 = vld [vmem:[#allocation2 + $0x10] sm:$0xff]
        %v279 = vld [vmem:[#allocation2 + $0x18] sm:$0xff]
        %v280 = vld [vmem:[#allocation2 + $0x20] sm:$0xff]
        %v281 = vld [vmem:[#allocation2 + $0x28] sm:$0xff]
        %v282 = vld [vmem:[#allocation2 + $0x30] sm:$0xff]
        %v283 = vld [vmem:[#allocation2 + $0x38] sm:$0xff]
        %v284 = vld [vmem:[#allocation2 + $0x40] sm:$0xff]
        %v285 = vld [vmem:[#allocation2 + $0x48] sm:$0xff]
        %v286 = vld [vmem:[#allocation2 + $0x50] sm:$0xff]
        %v287 = vld [vmem:[#allocation2 + $0x58] sm:$0xff]
        %v288 = vld [vmem:[%s227] sm:$0xff]
        %v289 = vld [vmem:[%s227 + $0x8] sm:$0xff]
        %v290 = vld [vmem:[%s227 + $0x10] sm:$0xff]
        %v291 = vld [vmem:[%s227 + $0x18] sm:$0xff]
        %v292 = vld [vmem:[%s227 + $0x20] sm:$0xff]
        %v293 = vld [vmem:[%s227 + $0x28] sm:$0xff]
        %v294 = vld [vmem:[%s227 + $0x30] sm:$0xff]
        %v295 = vld [vmem:[%s227 + $0x38] sm:$0xff]
        %v296 = vld [vmem:[%s227 + $0x40] sm:$0xff]
        %v297 = vld [vmem:[%s227 + $0x48] sm:$0xff]
        %v298 = vld [vmem:[%s227 + $0x50] sm:$0xff]
        %v299 = vld [vmem:[%s227 + $0x58] sm:$0xff]
        %v300 = vld [vmem:[%s227 + $0x60] sm:$0xff]
        %v301 = vld [vmem:[%s227 + $0x68] sm:$0xff]
        %v302 = vld [vmem:[%s227 + $0x70] sm:$0xff]
        %v303 = vld [vmem:[%s227 + $0x78] sm:$0xff]
        %v304 = vld [vmem:[%s227 + $0x80] sm:$0xff]
        %v305 = vld [vmem:[%s227 + $0x88] sm:$0xff]
        %v306 = vld [vmem:[%s227 + $0x90] sm:$0xff]
        %v307 = vld [vmem:[%s227 + $0x98] sm:$0xff]
        %v308 = vld [vmem:[%s227 + $0xa0] sm:$0xff]
        %v309 = vld [vmem:[%s227 + $0xa8] sm:$0xff]
        %v310 = vld [vmem:[%s227 + $0xb0] sm:$0xff]
        %v311 = vld [vmem:[%s227 + $0xb8] sm:$0xff]
        %v312 = vld [vmem:[%s227 + $0xc0] sm:$0xff]
        %v313 = vld [vmem:[%s227 + $0xc8] sm:$0xff]
        %v314 = vld [vmem:[%s227 + $0xd0] sm:$0xff]
        %v315 = vld [vmem:[%s227 + $0xd8] sm:$0xff]
        %v316 = vld [vmem:[%s227 + $0xe0] sm:$0xff]
        %v317 = vld [vmem:[%s227 + $0xe8] sm:$0xff]
        %v318 = vld [vmem:[%s227 + $0xf0] sm:$0xff]
        %v319 = vld [vmem:[%s227 + $0xf8] sm:$0xff]
        %320 = vmatprep.subr.mxu0 0.0
        %321 = vmatpush1.msra.mxu0 %v303
        %322 = vmatprep.subr.mxu0 0.0
        %323 = vmatpush1.msra.mxu0 %v302
        %324 = vmatprep.subr.mxu0 0.0
        %325 = vmatpush1.msra.mxu0 %v301
        %326 = vmatprep.subr.mxu0 0.0
        %327 = vmatpush1.msra.mxu0 %v300
        %328 = vmatprep.subr.mxu0 0.0
        %329 = vmatpush1.msra.mxu0 %v299
        %330 = vmatprep.subr.mxu0 0.0
        %331 = vmatpush1.msra.mxu0 %v298
        %332 = vmatprep.subr.mxu0 0.0
        %333 = vmatpush1.msra.mxu0 %v297
        %334 = vmatprep.subr.mxu0 0.0
        %335 = vmatpush1.msra.mxu0 %v296
        %336 = vmatprep.subr.mxu0 0.0
        %337 = vmatpush1.msra.mxu0 %v295
        %338 = vmatprep.subr.mxu0 0.0
        %339 = vmatpush1.msra.mxu0 %v294
        %340 = vmatprep.subr.mxu0 0.0
        %341 = vmatpush1.msra.mxu0 %v293
        %342 = vmatprep.subr.mxu0 0.0
        %343 = vmatpush1.msra.mxu0 %v292
        %344 = vmatprep.subr.mxu0 0.0
        %345 = vmatpush1.msra.mxu0 %v291
        %346 = vmatprep.subr.mxu0 0.0
        %347 = vmatpush1.msra.mxu0 %v290
        %348 = vmatprep.subr.mxu0 0.0
        %349 = vmatpush1.msra.mxu0 %v289
        %350 = vmatprep.subr.mxu0 0.0
        %351 = vmatpush1.msra.mxu0 %v288
        %352 = vmatprep.subr.mxu0 0.0
        %353 = vmatpush2.msra.mxu0 %v319
        %354 = vmatprep.subr.mxu0 0.0
        %355 = vmatpush2.msra.mxu0 %v318
        %356 = vmatprep.subr.mxu0 0.0
        %357 = vmatpush2.msra.mxu0 %v317
        %358 = vmatprep.subr.mxu0 0.0
        %359 = vmatpush2.msra.mxu0 %v316
        %360 = vmatprep.subr.mxu0 0.0
        %361 = vmatpush2.msra.mxu0 %v315
        %362 = vmatprep.subr.mxu0 0.0
        %363 = vmatpush2.msra.mxu0 %v314
        %364 = vmatprep.subr.mxu0 0.0
        %365 = vmatpush2.msra.mxu0 %v313
        %366 = vmatprep.subr.mxu0 0.0
        %367 = vmatpush2.msra.mxu0 %v312
        %368 = vmatprep.subr.mxu0 0.0
        %369 = vmatpush2.msra.mxu0 %v311
        %370 = vmatprep.subr.mxu0 0.0
        %371 = vmatpush2.msra.mxu0 %v310
        %372 = vmatprep.subr.mxu0 0.0
        %373 = vmatpush2.msra.mxu0 %v309
        %374 = vmatprep.subr.mxu0 0.0
        %375 = vmatpush2.msra.mxu0 %v308
        %376 = vmatprep.subr.mxu0 0.0
        %377 = vmatpush2.msra.mxu0 %v307
        %378 = vmatprep.subr.mxu0 0.0
        %379 = vmatpush2.msra.mxu0 %v306
        %380 = vmatprep.subr.mxu0 0.0
        %381 = vmatpush2.msra.mxu0 %v305
        %382 = vmatprep.subr.mxu0 0.0
        %383 = vmatpush2.msra.mxu0 %v304
        %384 = vmatprep.mubr.f32.mxu0 %v277
        %385 = vmatmul.mubr.f32.gmra.mxu0 %v276
        %v386 = vpop.f32.mrf.mxu0
        %v387 = vadd.f32 0.0, %v386
        %v388 = vpop.f32.mrf.mxu0
        %389 = vmatprep.mubr.f32.mxu0 %v279
        %390 = vmatmul.mubr.f32.gmra.mxu0 %v278
        %v391 = vpop.f32.mrf.mxu0
        %v392 = vadd.f32 0.0, %v391
        %v393 = vpop.f32.mrf.mxu0
        %394 = vmatprep.mubr.f32.mxu0 %v281
        %395 = vmatmul.mubr.f32.gmra.mxu0 %v280
        %v396 = vpop.f32.mrf.mxu0
        %v397 = vadd.f32 0.0, %v396
        %v398 = vpop.f32.mrf.mxu0
        %399 = vmatprep.mubr.f32.mxu0 %v283
        %400 = vmatmul.mubr.f32.gmra.mxu0 %v282
        %v401 = vpop.f32.mrf.mxu0
        %v402 = vadd.f32 0.0, %v401
        %v403 = vpop.f32.mrf.mxu0
        %404 = vmatprep.mubr.f32.mxu0 %v285
        %405 = vmatmul.mubr.f32.gmra.mxu0 %v284
        %v406 = vpop.f32.mrf.mxu0
        %v407 = vadd.f32 0.0, %v406
        %v408 = vpop.f32.mrf.mxu0
        %409 = vmatprep.mubr.f32.mxu0 %v287
        %410 = vmatmul.mubr.f32.gmra.mxu0 %v286
        %v411 = vpop.f32.mrf.mxu0
        %v412 = vadd.f32 0.0, %v411
        %v413 = vpop.f32.mrf.mxu0
        %414 = vdwg.mxu0
        %v415 = vadd.f32 %v270, %v387
        %v416 = vadd.f32 %v271, %v392
        %v417 = vadd.f32 %v272, %v397
        %v418 = vadd.f32 %v273, %v402
        %v419 = vadd.f32 %v274, %v407
        %v420 = vadd.f32 %v275, %v412
        %421 = vst [vmem:[%s252] sm:$0xff] %v415
        %422 = vst [vmem:[%s252 + $0x8] sm:$0xff] %v416
        %423 = vst [vmem:[%s252 + $0x10] sm:$0xff] %v417
        %424 = vst [vmem:[%s252 + $0x18] sm:$0xff] %v418
        %425 = vst [vmem:[%s252 + $0x20] sm:$0xff] %v419
        %426 = vst [vmem:[%s252 + $0x28] sm:$0xff] %v420
        // Predicated region
        $region45: #{tpu_custom_call.1} parent=31 // pred_check
          %p427 = pneg %p260
        $region46: #{tpu_custom_call.1} parent=31 // pred_check_branch
          %429 = sbr.rel (%p427) target = $region48
        $region47: #{tpu_custom_call.1} parent=31 // pred_region
          %v430 = vld [vmem:[%s252] sm:$0xff]
          %v431 = vld [vmem:[%s252 + $0x8] sm:$0xff]
          %v432 = vld [vmem:[%s252 + $0x10] sm:$0xff]
          %v433 = vld [vmem:[%s252 + $0x18] sm:$0xff]
          %v434 = vld [vmem:[%s252 + $0x20] sm:$0xff]
          %v435 = vld [vmem:[%s252 + $0x28] sm:$0xff]
          %v436 = vld [vmem:[%s258] sm:$0x1]
          %v438 = vlaneseq
          %v439 = vshrl.u32 %v438, 7
          %v440 = vsub.s32 0, %v439
          %v441 = vrot.slane %v436, %v440
          %v443 = vadd.f32 %v430, %v441
          %v444 = vadd.f32 %v431, %v441
          %v445 = vadd.f32 %v432, %v441
          %v446 = vadd.f32 %v433, %v441
          %v447 = vadd.f32 %v434, %v441
          %v448 = vadd.f32 %v435, %v441
          %449 = vst [vmem:[%s252] sm:$0xff] %v443
          %450 = vst [vmem:[%s252 + $0x8] sm:$0xff] %v444
          %451 = vst [vmem:[%s252 + $0x10] sm:$0xff] %v445
          %452 = vst [vmem:[%s252 + $0x18] sm:$0xff] %v446
          %453 = vst [vmem:[%s252 + $0x20] sm:$0xff] %v447
          %454 = vst [vmem:[%s252 + $0x28] sm:$0xff] %v448
        $region48: #{tpu_custom_call.1} parent=31 // pred_fallthru
          _
        %s455 = sand.u32 %s132, 1
        %s456 = scalar_lea.sflag [#allocation4], %s455
        %s457 = sand.u32 %s132, 1
        %s458 = smul.addr %s457, 48
        %s459 = scalar_lea.vmem [#allocation7], %s458
        // Predicated region
        $region49: #{tpu_custom_call.1} parent=31 // pred_check
          %p460 = pneg %p142
        $region50: #{tpu_custom_call.1} parent=31 // pred_check_branch
          %462 = sbr.rel (%p460) target = $region52
        $region51: #{tpu_custom_call.1} parent=31 // pred_region
          %s463 = smul.u32 6, %s26
          %s465 = ssub.s32 768, 768
          %466 = vsyncadd %s456, %s465
          %s467 = smul.addr %s463, 2
          %s468 = sadd.s32 %s27, %s467
          %s469 = smul.addr %s468, 128
          %s470 = scalar_lea.hbm %s3, %s469
          %s471 = sshll.u32 %s459, 4
          %s472 = int_to_ptr.vmem [resolvable:$true] %s471
          %477 = dma.vmem_to_hbm [thread:$0]  %s472, 768, %s470, %s456, 128, 256, 8
        $region52: #{tpu_custom_call.1} parent=31 // pred_fallthru
          _
      $region32: #{tpu_custom_call.1} parent=5 // pred_fallthru
        _
      %p478 = scmp.le.s32.totalorder 2, %s16
      // Predicated region
      $region53: #{tpu_custom_call.1} parent=5 // pred_check
        %p479 = pneg %p478
      $region54: #{tpu_custom_call.1} parent=5 // pred_check_branch
        %481 = sbr.rel (%p479) target = $region56
      $region55: #{tpu_custom_call.1} parent=5 // pred_region
        %s482 = ssub.s32 %s16, 2
        // Predicated region
        $region57: #{tpu_custom_call.1} parent=55 // pred_check
          %p483 = pneg %p148
        $region58: #{tpu_custom_call.1} parent=55 // pred_check_branch
          %485 = sbr.rel (%p483) target = $region60
        $region59: #{tpu_custom_call.1} parent=55 // pred_region
          %s486 = sand.u32 %s133, 1
          %s487 = scalar_lea.sflag [#allocation4], %s486
          %s488 = sand.u32 %s133, 1
          %s489 = smul.addr %s488, 48
          %s490 = scalar_lea.vmem [#allocation7], %s489
          %491 = dma.done %s487, 768
        $region60: #{tpu_custom_call.1} parent=55 // pred_fallthru
          _
      $region56: #{tpu_custom_call.1} parent=5 // pred_fallthru
        _
    $region6: #{tpu_custom_call.1} parent=1 // loop_footer
      %s20 = sadd.s32 1, %s16
    $region7: #{tpu_custom_call.1} parent=1 // loop_footer_branch
      %15 = sbr.rel target = $region3
    $region8: #{tpu_custom_call.1} parent=1 // loop_exit
      _
    %492 = vsyncpa [#allocation3], 1
    %s493 = scalar_lea.sflag [#allocation3], 1
    %494 = vsyncpa %s493, 1
    %495 = vsyncpa [#allocation6], 1
    %s496 = scalar_lea.sflag [#allocation6], 1
    %497 = vsyncpa %s496, 1
    %498 = vsyncpa [#allocation4], 1
    %s499 = scalar_lea.sflag [#allocation4], 1
    %500 = vsyncpa %s499, 1

</llo_original>
